<compile_context>
chip_gen: v7x
topology: tpu7x:2x2x1
jax: 0.10.0
libtpu: 0.0.40
codegen_flags: <defaults>
</compile_context>

<pallas_src>
import numpy as np
import jax
import jax.numpy as jnp
from jax.experimental import pallas as pl
from jax.experimental.pallas import tpu as pltpu


def _cdiv(a, b):
    return -(-a // b)


# ----------------------------------------------------------------------------
# Parameter construction (mirrors VisionRotaryEmbeddingFast.__init__, 'lang').
# ----------------------------------------------------------------------------
def build_rope_tables(dim, pt_seq_len=16, ft_seq_len=None, theta=10000.0):
    if ft_seq_len is None:
        ft_seq_len = pt_seq_len
    freqs = 1.0 / theta ** (np.arange(0, dim, 2)[: dim // 2].astype(np.float32) / dim)
    t = np.arange(ft_seq_len, dtype=np.float32) / ft_seq_len * pt_seq_len
    f = np.einsum("i,f->if", t, freqs)                      # (ft, dim//2)
    f = np.repeat(f, 2, axis=-1)                            # '... n -> ... (n r)', r=2
    fa = np.broadcast_to(f[:, None, :], (ft_seq_len, ft_seq_len, dim))
    fb = np.broadcast_to(f[None, :, :], (ft_seq_len, ft_seq_len, dim))
    full = np.concatenate([fa, fb], axis=-1)                # (ft, ft, 2*dim)
    D = 2 * dim
    freqs_cos = np.cos(full).reshape(-1, D).astype(np.float32)   # (ft*ft, D)
    freqs_sin = np.sin(full).reshape(-1, D).astype(np.float32)   # (ft*ft, D)
    return jnp.asarray(freqs_cos), jnp.asarray(freqs_sin)


# ----------------------------------------------------------------------------
# Pallas kernel: out = t * cos + rotate_half(t) * sin
#   rotate_half sign + lane parity are pre-folded into sin_e / sin_o tables:
#     even lane j: out[j] = x[j]*cos[j] + x[j+1]*(-sin[j])
#     odd  lane j: out[j] = x[j]*cos[j] + x[j-1]*(+sin[j])
# ----------------------------------------------------------------------------
def rope_kernel(t_ref, cos_ref, sin_e_ref, sin_o_ref, o_ref):
    x = t_ref[...].astype(jnp.float32)                # (TB, TC), lane-dense
    nd = x.shape[-1]
    x_next = pltpu.roll(x, nd - 1, axis=1)            # x_next[j] = x[j+1] (wrap unused: sin_e=0 there)
    x_prev = pltpu.roll(x, 1, axis=1)                 # x_prev[j] = x[j-1] (wrap unused: sin_o=0 there)
    out = x * cos_ref[...] + x_next * sin_e_ref[...] + x_prev * sin_o_ref[...]
    o_ref[...] = out.astype(o_ref.dtype)


# ----------------------------------------------------------------------------
# Per-chip tile target + scoped-VMEM limit.
# ----------------------------------------------------------------------------
def _chip_tuning():
    try:
        info = pltpu.get_tpu_info()
        vmem_cap = int(info.vmem_capacity_bytes)
    except Exception:
        # Unknown part: stay inside every chip's default scoped VMEM.
        return 2 << 20, 32 << 20
    if vmem_cap <= (64 << 20):          # v7x-class: 64 MiB physical VMEM per TC
        return 4 << 20, 48 << 20
    return 6 << 20, 64 << 20            # v5e / v6e: 128 MiB physical VMEM


def _auto_tiles(BH, ND, itemsize, tile_target):
    """Pick (TB, TC): TB multiple of 8 (or == BH), TC multiple of 128 (or == ND)."""
    row_bytes = ND * itemsize
    if row_bytes <= tile_target:
        TC = ND
        tb_target = max(1, tile_target // row_bytes)
        if BH <= tb_target:
            TB = BH                                   # full-dim block: always legal
        else:
            TB = max(8, (tb_target // 8) * 8)
            # keep >= 4 row-blocks so both TensorCores (v7x megacore) get work
            while TB > 8 and _cdiv(BH, TB) < 4:
                TB = max(8, ((TB // 2) // 8) * 8)
    else:
        # huge rows (e.g. B=1 inference): chunk the ND axis instead
        TB = min(BH, 8)
        tc_target = max(128, tile_target // max(1, TB * itemsize))
        TC = min(ND, max(512, (tc_target // 128) * 128))
    return TB, TC


def vision_rope_fast(t, freqs_cos, freqs_sin, *, block_rows=None, block_cols=None):
    """t: (..., N, D); applies the 2D rotary embedding exactly like the module."""
    orig_shape = t.shape
    N, D = orig_shape[-2], orig_shape[-1]
    ND = N * D
    assert freqs_cos.shape == (N, D) and freqs_sin.shape == (N, D)
    assert D % 2 == 0 and ND % 128 == 0, "flattened rotary size must be lane-aligned"

    t_flat = t.reshape(-1, ND)                        # contiguous -> free reshape
    BH = t_flat.shape[0]
    itemsize = t_flat.dtype.itemsize

    cos_flat = freqs_cos.reshape(1, ND).astype(jnp.float32)
    sin_flat = freqs_sin.reshape(1, ND).astype(jnp.float32)
    lane_par = (jnp.arange(ND) % 2).reshape(1, ND)
    # Pre-masked, sign-folded sin tables (see kernel docstring):
    sin_e = jnp.where(lane_par == 0, -sin_flat, 0.0)  # even lanes: -sin, odd: 0
    sin_o = jnp.where(lane_par == 1, sin_flat, 0.0)   # odd lanes:  +sin, even: 0

    tile_target, vmem_limit = _chip_tuning()
    TB, TC = _auto_tiles(BH, ND, itemsize, tile_target)
    if block_rows is not None:
        TB = block_rows
    if block_cols is not None:
        TC = block_cols

    nb = _cdiv(BH, TB)
    nc = _cdiv(ND, TC)

    out = pl.pallas_call(
        rope_kernel,
        out_shape=jax.ShapeDtypeStruct((BH, ND), t.dtype),
        grid=(nb, nc),
        in_specs=[
            pl.BlockSpec((TB, TC), lambda b, c: (b, c)),   # t block (lane-dense)
            pl.BlockSpec((1, TC), lambda b, c: (0, c)),    # cos
            pl.BlockSpec((1, TC), lambda b, c: (0, c)),    # sin (even lanes, signed)
            pl.BlockSpec((1, TC), lambda b, c: (0, c)),    # sin (odd lanes, signed)
        ],
        out_specs=pl.BlockSpec((TB, TC), lambda b, c: (b, c)),
        compiler_params=pltpu.CompilerParams(
            dimension_semantics=("parallel", "parallel"),
            vmem_limit_bytes=vmem_limit),
        cost_estimate=pl.CostEstimate(
            flops=5 * BH * ND,
            transcendentals=0,
            bytes_accessed=2 * BH * ND * itemsize + 3 * ND * 4),
    )(t_flat, cos_flat, sin_e, sin_o)

    return out.reshape(orig_shape)


# ----------------------------------------------------------------------------
# Pure-JAX reference (mirrors forward() + rotate_half) for verification.
# ----------------------------------------------------------------------------
def rotate_half_ref(x):
    x1 = x[..., 0::2]
    x2 = x[..., 1::2]
    return jnp.stack((-x2, x1), axis=-1).reshape(x.shape)


def rope_ref(t, freqs_cos, freqs_sin):
    return t * freqs_cos + rotate_half_ref(t) * freqs_sin


if __name__ == "__main__":
    # dim=16 per spatial axis -> D = 2*dim = 32 rotary features,
    # ft_seq_len = pt_seq_len = 8 -> N = 64 tokens (N*D = 2048 lanes).
    dim = 16
    pt_seq_len = 8
    D = 2 * dim
    N = pt_seq_len * pt_seq_len

    freqs_cos, freqs_sin = build_rope_tables(dim, pt_seq_len=pt_seq_len)

    # 1) Default auto-tiling, f32 activations: (B=2, H=3, N, D).
    key = jax.random.PRNGKey(0)
    t = jax.random.normal(key, (2, 3, N, D), dtype=jnp.float32)
    out = jax.block_until_ready(vision_rope_fast(t, freqs_cos, freqs_sin))
    ref = rope_ref(t, freqs_cos, freqs_sin)
    np.testing.assert_allclose(np.asarray(out), np.asarray(ref), rtol=1e-5, atol=1e-5)

    # 2) Forced multi-block grid: ragged last row-block (BH=24, TB=16) and
    #    ND chunking (TC=512) -> exercises the pad-free masked-edge path.
    t2 = jax.random.normal(jax.random.PRNGKey(1), (4, 6, N, D), dtype=jnp.float32)
    out2 = jax.block_until_ready(
        vision_rope_fast(t2, freqs_cos, freqs_sin, block_rows=16, block_cols=512))
    ref2 = rope_ref(t2, freqs_cos, freqs_sin)
    np.testing.assert_allclose(np.asarray(out2), np.asarray(ref2), rtol=1e-5, atol=1e-5)

    # 3) bf16 activations (caller keeps t in bf16; kernel computes f32, casts back).
    t3 = t.astype(jnp.bfloat16)
    out3 = jax.block_until_ready(vision_rope_fast(t3, freqs_cos, freqs_sin))
    ref3 = rope_ref(t3.astype(jnp.float32), freqs_cos, freqs_sin)
    np.testing.assert_allclose(np.asarray(out3.astype(jnp.float32)), np.asarray(ref3),
                               rtol=2e-2, atol=2e-2)

    print("KERNEL_OK")
</pallas_src>

<mosaic_0001>
module attributes {stable_mosaic.version = 11 : i64} {
  func.func @rope_kernel(%arg0: i32, %arg1: i32, %arg2: memref<6x2048xf32, #tpu.memory_space<vmem>>, %arg3: memref<1x2048xf32, #tpu.memory_space<vmem>>, %arg4: memref<1x2048xf32, #tpu.memory_space<vmem>>, %arg5: memref<1x2048xf32, #tpu.memory_space<vmem>>, %arg6: memref<6x2048xf32, #tpu.memory_space<vmem>>) attributes {dimension_semantics = [#tpu.dimension_semantics<parallel>, #tpu.dimension_semantics<parallel>], iteration_bounds = array<i64: 1, 1>, scalar_prefetch = 0 : i64, scratch_operands = 0 : i64, tpu.core_type = #tpu.core_type<tc>, window_params = [{transform_indices = @transform_0, window_bounds = array<i64: 6, 2048>}, {transform_indices = @transform_1, window_bounds = array<i64: 1, 2048>}, {transform_indices = @transform_2, window_bounds = array<i64: 1, 2048>}, {transform_indices = @transform_3, window_bounds = array<i64: 1, 2048>}, {transform_indices = @transform_4, window_bounds = array<i64: 6, 2048>}]} {
    %c0 = arith.constant 0 : index
    %c0_0 = arith.constant 0 : index
    %0 = vector.load %arg2[%c0, %c0_0] : memref<6x2048xf32, #tpu.memory_space<vmem>>, vector<6x2048xf32>
    %c2047_i32 = arith.constant 2047 : i32
    %1 = tpu.dynamic_rotate %0 by %c2047_i32 dim 1 : vector<6x2048xf32>, i32 -> vector<6x2048xf32>
    %c1_i32 = arith.constant 1 : i32
    %2 = tpu.dynamic_rotate %0 by %c1_i32 dim 1 : vector<6x2048xf32>, i32 -> vector<6x2048xf32>
    %c0_1 = arith.constant 0 : index
    %c0_2 = arith.constant 0 : index
    %3 = vector.load %arg3[%c0_1, %c0_2] : memref<1x2048xf32, #tpu.memory_space<vmem>>, vector<1x2048xf32>
    %4 = vector.broadcast %3 : vector<1x2048xf32> to vector<6x2048xf32>
    %5 = arith.mulf %0, %4 : vector<6x2048xf32>
    %c0_3 = arith.constant 0 : index
    %c0_4 = arith.constant 0 : index
    %6 = vector.load %arg4[%c0_3, %c0_4] : memref<1x2048xf32, #tpu.memory_space<vmem>>, vector<1x2048xf32>
    %7 = vector.broadcast %6 : vector<1x2048xf32> to vector<6x2048xf32>
    %8 = arith.mulf %1, %7 : vector<6x2048xf32>
    %9 = arith.addf %5, %8 : vector<6x2048xf32>
    %c0_5 = arith.constant 0 : index
    %c0_6 = arith.constant 0 : index
    %10 = vector.load %arg5[%c0_5, %c0_6] : memref<1x2048xf32, #tpu.memory_space<vmem>>, vector<1x2048xf32>
    %11 = vector.broadcast %10 : vector<1x2048xf32> to vector<6x2048xf32>
    %12 = arith.mulf %2, %11 : vector<6x2048xf32>
    %13 = arith.addf %9, %12 : vector<6x2048xf32>
    %c0_7 = arith.constant 0 : index
    %c0_8 = arith.constant 0 : index
    %14 = vector.load %arg6[%c0_7, %c0_8] : memref<6x2048xf32, #tpu.memory_space<vmem>>, vector<6x2048xf32>
    tpu.vector_store %arg6[%c0_7, %c0_8], %13 {strides = array<i32>} : memref<6x2048xf32, #tpu.memory_space<vmem>>, vector<6x2048xf32>,
    return
  }
  func.func @transform_0(%arg0: i32, %arg1: i32) -> (i32, i32) {
    %c0_i32 = arith.constant 0 : i32
    return %arg0, %arg1 : i32, i32
  }
  func.func @transform_1(%arg0: i32, %arg1: i32) -> (i32, i32) {
    %c0_i32 = arith.constant 0 : i32
    %c0_i32_0 = arith.constant 0 : i32
    return %c0_i32, %arg1 : i32, i32
  }
  func.func @transform_2(%arg0: i32, %arg1: i32) -> (i32, i32) {
    %c0_i32 = arith.constant 0 : i32
    %c0_i32_0 = arith.constant 0 : i32
    return %c0_i32, %arg1 : i32, i32
  }
  func.func @transform_3(%arg0: i32, %arg1: i32) -> (i32, i32) {
    %c0_i32 = arith.constant 0 : i32
    %c0_i32_0 = arith.constant 0 : i32
    return %c0_i32, %arg1 : i32, i32
  }
  func.func @transform_4(%arg0: i32, %arg1: i32) -> (i32, i32) {
    %c0_i32 = arith.constant 0 : i32
    return %arg0, %arg1 : i32, i32
  }
}

</mosaic_0001>

<llo_original>
// kernel: tpu_custom_call.1
$region0: #{tpu_custom_call.1}
  #allocation0 [shape = 'u32[]', space=smem, size = 0x4, offset = 0x4, fixed_abs, tag = 'smem constant byte address 0x4 - core index']
  #allocation1 [shape = 'u32[144,128]{1,0:T(1,128)}', space=vmem, size = 0x12000, scoped, tag = 'internal scratch']
  %s0 = inlined_call_operand.hbm [shape: f32[6,2048], index: 0, kind: input, shape index: {}]
  %s1 = inlined_call_operand.hbm [shape: f32[1,2048], index: 1, kind: input, shape index: {}]
  %s2 = inlined_call_operand.hbm [shape: f32[1,2048], index: 2, kind: input, shape index: {}]
  %s3 = inlined_call_operand.hbm [shape: f32[1,2048], index: 3, kind: input, shape index: {}]
  %s4 = inlined_call_operand.hbm [shape: f32[6,2048], index: 4, kind: output, shape index: {}]
  %s5 = sld [smem:[#allocation0]]
  $region42: #{tpu_custom_call.1} parent=0
    _
  %s7 = ssub.s32 1, %s5
  %s8 = scalar_select 0, %s7, %s5
  $region1: #{tpu_custom_call.1} parent=0
    #allocation2 [shape = 'u8[65536]{0}', space=vmem, size = 0x10000, scoped, tag = 'input window, operand 0, single buffered']
    #allocation3 [shape = 's32[1]{0}', space=sflag, size = 0x4, scoped, tag = 'scoped memory for tpu_custom_call.1']
    #allocation4 [shape = 's32[1]{0}', space=sflag, size = 0x4, scoped, tag = 'scoped memory for tpu_custom_call.1']
    #allocation5 [shape = 'u8[8192]{0}', space=vmem, size = 0x2000, scoped, tag = 'input window, operand 1, single buffered']
    #allocation6 [shape = 's32[1]{0}', space=sflag, size = 0x4, scoped, tag = 'scoped memory for tpu_custom_call.1']
    #allocation7 [shape = 'u8[8192]{0}', space=vmem, size = 0x2000, scoped, tag = 'input window, operand 2, single buffered']
    #allocation8 [shape = 'u8[8192]{0}', space=vmem, size = 0x2000, scoped, tag = 'input window, operand 3, single buffered']
    #allocation9 [shape = 's32[1]{0}', space=sflag, size = 0x4, scoped, tag = 'scoped memory for tpu_custom_call.1']
    #allocation10 [shape = 'u8[65536]{0}', space=vmem, size = 0x10000, scoped, tag = 'output window, operand 0, single buffered']
    %9 = vsyncpa [#allocation3], 0
    %10 = vsyncpa [#allocation6], 0
    %11 = vsyncpa [#allocation9], 0
    %12 = vsyncpa [#allocation4], 0
    // Predicated region
    $region2: #{tpu_custom_call.1} parent=1 // pred_check
      _
    $region3: #{tpu_custom_call.1} parent=1 // pred_check_branch
      %14 = sbr.rel (0) target = $region5
    $region4: #{tpu_custom_call.1} parent=1 // pred_region
      %s16 = ssub.s32 2048, 2048
      %17 = vsyncadd [#allocation3], %s16
      %s19 = sshll.u32 [#allocation2], 4
      %s20 = int_to_ptr.vmem [resolvable:$true] %s19
      %22 = dma.hbm_to_vmem [thread:$0]  %s0, 2048, %s20, [#allocation3]
    $region5: #{tpu_custom_call.1} parent=1 // pred_fallthru
      _
    // Predicated region
    $region6: #{tpu_custom_call.1} parent=1 // pred_check
      _
    $region7: #{tpu_custom_call.1} parent=1 // pred_check_branch
      %24 = sbr.rel (0) target = $region9
    $region8: #{tpu_custom_call.1} parent=1 // pred_region
      %s26 = ssub.s32 256, 256
      %27 = vsyncadd [#allocation6], %s26
      %s29 = sshll.u32 [#allocation5], 4
      %s30 = int_to_ptr.vmem [resolvable:$true] %s29
      %32 = dma.hbm_to_vmem [thread:$0]  %s1, 256, %s30, [#allocation6]
    $region9: #{tpu_custom_call.1} parent=1 // pred_fallthru
      _
    // Predicated region
    $region10: #{tpu_custom_call.1} parent=1 // pred_check
      _
    $region11: #{tpu_custom_call.1} parent=1 // pred_check_branch
      %34 = sbr.rel (0) target = $region13
    $region12: #{tpu_custom_call.1} parent=1 // pred_region
      %s36 = ssub.s32 256, 256
      %37 = vsyncadd [#allocation6], %s36
      %s39 = sshll.u32 [#allocation7], 4
      %s40 = int_to_ptr.vmem [resolvable:$true] %s39
      %42 = dma.hbm_to_vmem [thread:$0]  %s2, 256, %s40, [#allocation6]
    $region13: #{tpu_custom_call.1} parent=1 // pred_fallthru
      _
    // Predicated region
    $region14: #{tpu_custom_call.1} parent=1 // pred_check
      _
    $region15: #{tpu_custom_call.1} parent=1 // pred_check_branch
      %44 = sbr.rel (0) target = $region17
    $region16: #{tpu_custom_call.1} parent=1 // pred_region
      %s46 = ssub.s32 256, 256
      %47 = vsyncadd [#allocation9], %s46
      %s49 = sshll.u32 [#allocation8], 4
      %s50 = int_to_ptr.vmem [resolvable:$true] %s49
      %52 = dma.hbm_to_vmem [thread:$0]  %s3, 256, %s50, [#allocation9]
    $region17: #{tpu_custom_call.1} parent=1 // pred_fallthru
      _
    // Predicated region
    $region18: #{tpu_custom_call.1} parent=1 // pred_check
      _
    $region19: #{tpu_custom_call.1} parent=1 // pred_check_branch
      %54 = sbr.rel (0) target = $region21
    $region20: #{tpu_custom_call.1} parent=1 // pred_region
      %55 = dma.done [#allocation3], 2048
    $region21: #{tpu_custom_call.1} parent=1 // pred_fallthru
      _
    // Predicated region
    $region22: #{tpu_custom_call.1} parent=1 // pred_check
      _
    $region23: #{tpu_custom_call.1} parent=1 // pred_check_branch
      %57 = sbr.rel (0) target = $region25
    $region24: #{tpu_custom_call.1} parent=1 // pred_region
      %58 = dma.done [#allocation6], 256
    $region25: #{tpu_custom_call.1} parent=1 // pred_fallthru
      _
    // Predicated region
    $region26: #{tpu_custom_call.1} parent=1 // pred_check
      _
    $region27: #{tpu_custom_call.1} parent=1 // pred_check_branch
      %60 = sbr.rel (0) target = $region29
    $region28: #{tpu_custom_call.1} parent=1 // pred_region
      %61 = dma.done [#allocation6], 256
    $region29: #{tpu_custom_call.1} parent=1 // pred_fallthru
      _
    // Predicated region
    $region30: #{tpu_custom_call.1} parent=1 // pred_check
      _
    $region31: #{tpu_custom_call.1} parent=1 // pred_check_branch
      %63 = sbr.rel (0) target = $region33
    $region32: #{tpu_custom_call.1} parent=1 // pred_region
      %64 = dma.done [#allocation9], 256
    $region33: #{tpu_custom_call.1} parent=1 // pred_fallthru
      _
    %v65 = vld [vmem:[#allocation2] sm:$0x3f]
    %v66 = vld [vmem:[#allocation2 + $0x8] sm:$0x3f]
    %v67 = vld [vmem:[#allocation2 + $0x10] sm:$0x3f]
    %v68 = vld [vmem:[#allocation2 + $0x18] sm:$0x3f]
    %v69 = vld [vmem:[#allocation2 + $0x20] sm:$0x3f]
    %v70 = vld [vmem:[#allocation2 + $0x28] sm:$0x3f]
    %v71 = vld [vmem:[#allocation2 + $0x30] sm:$0x3f]
    %v72 = vld [vmem:[#allocation2 + $0x38] sm:$0x3f]
    %v73 = vld [vmem:[#allocation2 + $0x40] sm:$0x3f]
    %v74 = vld [vmem:[#allocation2 + $0x48] sm:$0x3f]
    %v75 = vld [vmem:[#allocation2 + $0x50] sm:$0x3f]
    %v76 = vld [vmem:[#allocation2 + $0x58] sm:$0x3f]
    %v77 = vld [vmem:[#allocation2 + $0x60] sm:$0x3f]
    %v78 = vld [vmem:[#allocation2 + $0x68] sm:$0x3f]
    %v79 = vld [vmem:[#allocation2 + $0x70] sm:$0x3f]
    %v80 = vld [vmem:[#allocation2 + $0x78] sm:$0x3f]
    %81 = vrot.lane.b32.xlu0 %v65, 127
    %v82 = vpop.permute.xlu0 %81
    %83 = vrot.lane.b32.xlu0 %v66, 127
    %v84 = vpop.permute.xlu0 %83
    %85 = vrot.lane.b32.xlu0 %v67, 127
    %v86 = vpop.permute.xlu0 %85
    %87 = vrot.lane.b32.xlu0 %v68, 127
    %v88 = vpop.permute.xlu0 %87
    %89 = vrot.lane.b32.xlu0 %v69, 127
    %v90 = vpop.permute.xlu0 %89
    %91 = vrot.lane.b32.xlu0 %v70, 127
    %v92 = vpop.permute.xlu0 %91
    %93 = vrot.lane.b32.xlu0 %v71, 127
    %v94 = vpop.permute.xlu0 %93
    %95 = vrot.lane.b32.xlu0 %v72, 127
    %v96 = vpop.permute.xlu0 %95
    %97 = vrot.lane.b32.xlu0 %v73, 127
    %v98 = vpop.permute.xlu0 %97
    %99 = vrot.lane.b32.xlu0 %v74, 127
    %v100 = vpop.permute.xlu0 %99
    %101 = vrot.lane.b32.xlu0 %v75, 127
    %v102 = vpop.permute.xlu0 %101
    %103 = vrot.lane.b32.xlu0 %v76, 127
    %v104 = vpop.permute.xlu0 %103
    %105 = vrot.lane.b32.xlu0 %v77, 127
    %v106 = vpop.permute.xlu0 %105
    %107 = vrot.lane.b32.xlu0 %v78, 127
    %v108 = vpop.permute.xlu0 %107
    %109 = vrot.lane.b32.xlu0 %v79, 127
    %v110 = vpop.permute.xlu0 %109
    %111 = vrot.lane.b32.xlu0 %v80, 127
    %v112 = vpop.permute.xlu0 %111
    %v113 = vlaneseq
    %v114 = vand.u32 %v113, 127
    %vm115 = vcmp.lt.s32.totalorder %v114, 127
    %v116 = vsel %vm115, %v110, %v112
    %v117 = vsel %vm115, %v108, %v110
    %v118 = vsel %vm115, %v106, %v108
    %v119 = vsel %vm115, %v104, %v106
    %v120 = vsel %vm115, %v102, %v104
    %v121 = vsel %vm115, %v100, %v102
    %v122 = vsel %vm115, %v98, %v100
    %v123 = vsel %vm115, %v96, %v98
    %v124 = vsel %vm115, %v94, %v96
    %v125 = vsel %vm115, %v92, %v94
    %v126 = vsel %vm115, %v90, %v92
    %v127 = vsel %vm115, %v88, %v90
    %v128 = vsel %vm115, %v86, %v88
    %v129 = vsel %vm115, %v84, %v86
    %v130 = vsel %vm115, %v82, %v84
    %v131 = vsel %vm115, %v112, %v82
    %132 = vrot.lane.b32.xlu0 %v65, 1
    %v133 = vpop.permute.xlu0 %132
    %134 = vrot.lane.b32.xlu0 %v66, 1
    %v135 = vpop.permute.xlu0 %134
    %136 = vrot.lane.b32.xlu0 %v67, 1
    %v137 = vpop.permute.xlu0 %136
    %138 = vrot.lane.b32.xlu0 %v68, 1
    %v139 = vpop.permute.xlu0 %138
    %140 = vrot.lane.b32.xlu0 %v69, 1
    %v141 = vpop.permute.xlu0 %140
    %142 = vrot.lane.b32.xlu0 %v70, 1
    %v143 = vpop.permute.xlu0 %142
    %144 = vrot.lane.b32.xlu0 %v71, 1
    %v145 = vpop.permute.xlu0 %144
    %146 = vrot.lane.b32.xlu0 %v72, 1
    %v147 = vpop.permute.xlu0 %146
    %148 = vrot.lane.b32.xlu0 %v73, 1
    %v149 = vpop.permute.xlu0 %148
    %150 = vrot.lane.b32.xlu0 %v74, 1
    %v151 = vpop.permute.xlu0 %150
    %152 = vrot.lane.b32.xlu0 %v75, 1
    %v153 = vpop.permute.xlu0 %152
    %154 = vrot.lane.b32.xlu0 %v76, 1
    %v155 = vpop.permute.xlu0 %154
    %156 = vrot.lane.b32.xlu0 %v77, 1
    %v157 = vpop.permute.xlu0 %156
    %158 = vrot.lane.b32.xlu0 %v78, 1
    %v159 = vpop.permute.xlu0 %158
    %160 = vrot.lane.b32.xlu0 %v79, 1
    %v161 = vpop.permute.xlu0 %160
    %162 = vrot.lane.b32.xlu0 %v80, 1
    %v163 = vpop.permute.xlu0 %162
    %vm164 = vcmp.lt.s32.totalorder %v114, 1
    %v165 = vsel %vm164, %v161, %v163
    %v166 = vsel %vm164, %v159, %v161
    %v167 = vsel %vm164, %v157, %v159
    %v168 = vsel %vm164, %v155, %v157
    %v169 = vsel %vm164, %v153, %v155
    %v170 = vsel %vm164, %v151, %v153
    %v171 = vsel %vm164, %v149, %v151
    %v172 = vsel %vm164, %v147, %v149
    %v173 = vsel %vm164, %v145, %v147
    %v174 = vsel %vm164, %v143, %v145
    %v175 = vsel %vm164, %v141, %v143
    %v176 = vsel %vm164, %v139, %v141
    %v177 = vsel %vm164, %v137, %v139
    %v178 = vsel %vm164, %v135, %v137
    %v179 = vsel %vm164, %v133, %v135
    %v180 = vsel %vm164, %v163, %v133
    %v181 = vld [vmem:[#allocation5] sm:$0xff]
    %v182 = vld [vmem:[#allocation5 + $0x8] sm:$0xff]
    %v185 = vlaneseq
    %v186 = vshrl.u32 %v185, 7
    %v187 = vsub.s32 0, %v186
    %v188 = vrot.slane %v181, %v187
    %v189 = vlaneseq
    %v190 = vshrl.u32 %v189, 7
    %v191 = vsub.s32 1, %v190
    %v192 = vrot.slane %v181, %v191
    %v193 = vlaneseq
    %v194 = vshrl.u32 %v193, 7
    %v195 = vsub.s32 2, %v194
    %v196 = vrot.slane %v181, %v195
    %v197 = vlaneseq
    %v198 = vshrl.u32 %v197, 7
    %v199 = vsub.s32 3, %v198
    %v200 = vrot.slane %v181, %v199
    %v201 = vlaneseq
    %v202 = vshrl.u32 %v201, 7
    %v203 = vsub.s32 4, %v202
    %v204 = vrot.slane %v181, %v203
    %v205 = vlaneseq
    %v206 = vshrl.u32 %v205, 7
    %v207 = vsub.s32 5, %v206
    %v208 = vrot.slane %v181, %v207
    %v209 = vlaneseq
    %v210 = vshrl.u32 %v209, 7
    %v211 = vsub.s32 6, %v210
    %v212 = vrot.slane %v181, %v211
    %v213 = vlaneseq
    %v214 = vshrl.u32 %v213, 7
    %v215 = vsub.s32 7, %v214
    %v216 = vrot.slane %v181, %v215
    %v217 = vlaneseq
    %v218 = vshrl.u32 %v217, 7
    %v219 = vsub.s32 0, %v218
    %v220 = vrot.slane %v182, %v219
    %v221 = vlaneseq
    %v222 = vshrl.u32 %v221, 7
    %v223 = vsub.s32 1, %v222
    %v224 = vrot.slane %v182, %v223
    %v225 = vlaneseq
    %v226 = vshrl.u32 %v225, 7
    %v227 = vsub.s32 2, %v226
    %v228 = vrot.slane %v182, %v227
    %v229 = vlaneseq
    %v230 = vshrl.u32 %v229, 7
    %v231 = vsub.s32 3, %v230
    %v232 = vrot.slane %v182, %v231
    %v233 = vlaneseq
    %v234 = vshrl.u32 %v233, 7
    %v235 = vsub.s32 4, %v234
    %v236 = vrot.slane %v182, %v235
    %v237 = vlaneseq
    %v238 = vshrl.u32 %v237, 7
    %v239 = vsub.s32 5, %v238
    %v240 = vrot.slane %v182, %v239
    %v241 = vlaneseq
    %v242 = vshrl.u32 %v241, 7
    %v243 = vsub.s32 6, %v242
    %v244 = vrot.slane %v182, %v243
    %v245 = vlaneseq
    %v246 = vshrl.u32 %v245, 7
    %v247 = vsub.s32 7, %v246
    %v248 = vrot.slane %v182, %v247
    %v265 = vmul.f32 %v65, %v188
    %v266 = vmul.f32 %v66, %v192
    %v267 = vmul.f32 %v67, %v196
    %v268 = vmul.f32 %v68, %v200
    %v269 = vmul.f32 %v69, %v204
    %v270 = vmul.f32 %v70, %v208
    %v271 = vmul.f32 %v71, %v212
    %v272 = vmul.f32 %v72, %v216
    %v273 = vmul.f32 %v73, %v220
    %v274 = vmul.f32 %v74, %v224
    %v275 = vmul.f32 %v75, %v228
    %v276 = vmul.f32 %v76, %v232
    %v277 = vmul.f32 %v77, %v236
    %v278 = vmul.f32 %v78, %v240
    %v279 = vmul.f32 %v79, %v244
    %v280 = vmul.f32 %v80, %v248
    %v281 = vld [vmem:[#allocation7] sm:$0xff]
    %v282 = vld [vmem:[#allocation7 + $0x8] sm:$0xff]
    %v285 = vlaneseq
    %v286 = vshrl.u32 %v285, 7
    %v287 = vsub.s32 0, %v286
    %v288 = vrot.slane %v281, %v287
    %v289 = vlaneseq
    %v290 = vshrl.u32 %v289, 7
    %v291 = vsub.s32 1, %v290
    %v292 = vrot.slane %v281, %v291
    %v293 = vlaneseq
    %v294 = vshrl.u32 %v293, 7
    %v295 = vsub.s32 2, %v294
    %v296 = vrot.slane %v281, %v295
    %v297 = vlaneseq
    %v298 = vshrl.u32 %v297, 7
    %v299 = vsub.s32 3, %v298
    %v300 = vrot.slane %v281, %v299
    %v301 = vlaneseq
    %v302 = vshrl.u32 %v301, 7
    %v303 = vsub.s32 4, %v302
    %v304 = vrot.slane %v281, %v303
    %v305 = vlaneseq
    %v306 = vshrl.u32 %v305, 7
    %v307 = vsub.s32 5, %v306
    %v308 = vrot.slane %v281, %v307
    %v309 = vlaneseq
    %v310 = vshrl.u32 %v309, 7
    %v311 = vsub.s32 6, %v310
    %v312 = vrot.slane %v281, %v311
    %v313 = vlaneseq
    %v314 = vshrl.u32 %v313, 7
    %v315 = vsub.s32 7, %v314
    %v316 = vrot.slane %v281, %v315
    %v317 = vlaneseq
    %v318 = vshrl.u32 %v317, 7
    %v319 = vsub.s32 0, %v318
    %v320 = vrot.slane %v282, %v319
    %v321 = vlaneseq
    %v322 = vshrl.u32 %v321, 7
    %v323 = vsub.s32 1, %v322
    %v324 = vrot.slane %v282, %v323
    %v325 = vlaneseq
    %v326 = vshrl.u32 %v325, 7
    %v327 = vsub.s32 2, %v326
    %v328 = vrot.slane %v282, %v327
    %v329 = vlaneseq
    %v330 = vshrl.u32 %v329, 7
    %v331 = vsub.s32 3, %v330
    %v332 = vrot.slane %v282, %v331
    %v333 = vlaneseq
    %v334 = vshrl.u32 %v333, 7
    %v335 = vsub.s32 4, %v334
    %v336 = vrot.slane %v282, %v335
    %v337 = vlaneseq
    %v338 = vshrl.u32 %v337, 7
    %v339 = vsub.s32 5, %v338
    %v340 = vrot.slane %v282, %v339
    %v341 = vlaneseq
    %v342 = vshrl.u32 %v341, 7
    %v343 = vsub.s32 6, %v342
    %v344 = vrot.slane %v282, %v343
    %v345 = vlaneseq
    %v346 = vshrl.u32 %v345, 7
    %v347 = vsub.s32 7, %v346
    %v348 = vrot.slane %v282, %v347
    %v365 = vmul.f32 %v130, %v288
    %v366 = vmul.f32 %v129, %v292
    %v367 = vmul.f32 %v128, %v296
    %v368 = vmul.f32 %v127, %v300
    %v369 = vmul.f32 %v126, %v304
    %v370 = vmul.f32 %v125, %v308
    %v371 = vmul.f32 %v124, %v312
    %v372 = vmul.f32 %v123, %v316
    %v373 = vmul.f32 %v122, %v320
    %v374 = vmul.f32 %v121, %v324
    %v375 = vmul.f32 %v120, %v328
    %v376 = vmul.f32 %v119, %v332
    %v377 = vmul.f32 %v118, %v336
    %v378 = vmul.f32 %v117, %v340
    %v379 = vmul.f32 %v116, %v344
    %v380 = vmul.f32 %v131, %v348
    %v381 = vadd.f32 %v265, %v365
    %v382 = vadd.f32 %v266, %v366
    %v383 = vadd.f32 %v267, %v367
    %v384 = vadd.f32 %v268, %v368
    %v385 = vadd.f32 %v269, %v369
    %v386 = vadd.f32 %v270, %v370
    %v387 = vadd.f32 %v271, %v371
    %v388 = vadd.f32 %v272, %v372
    %v389 = vadd.f32 %v273, %v373
    %v390 = vadd.f32 %v274, %v374
    %v391 = vadd.f32 %v275, %v375
    %v392 = vadd.f32 %v276, %v376
    %v393 = vadd.f32 %v277, %v377
    %v394 = vadd.f32 %v278, %v378
    %v395 = vadd.f32 %v279, %v379
    %v396 = vadd.f32 %v280, %v380
    %v397 = vld [vmem:[#allocation8] sm:$0xff]
    %v398 = vld [vmem:[#allocation8 + $0x8] sm:$0xff]
    %v401 = vlaneseq
    %v402 = vshrl.u32 %v401, 7
    %v403 = vsub.s32 0, %v402
    %v404 = vrot.slane %v397, %v403
    %v405 = vlaneseq
    %v406 = vshrl.u32 %v405, 7
    %v407 = vsub.s32 1, %v406
    %v408 = vrot.slane %v397, %v407
    %v409 = vlaneseq
    %v410 = vshrl.u32 %v409, 7
    %v411 = vsub.s32 2, %v410
    %v412 = vrot.slane %v397, %v411
    %v413 = vlaneseq
    %v414 = vshrl.u32 %v413, 7
    %v415 = vsub.s32 3, %v414
    %v416 = vrot.slane %v397, %v415
    %v417 = vlaneseq
    %v418 = vshrl.u32 %v417, 7
    %v419 = vsub.s32 4, %v418
    %v420 = vrot.slane %v397, %v419
    %v421 = vlaneseq
    %v422 = vshrl.u32 %v421, 7
    %v423 = vsub.s32 5, %v422
    %v424 = vrot.slane %v397, %v423
    %v425 = vlaneseq
    %v426 = vshrl.u32 %v425, 7
    %v427 = vsub.s32 6, %v426
    %v428 = vrot.slane %v397, %v427
    %v429 = vlaneseq
    %v430 = vshrl.u32 %v429, 7
    %v431 = vsub.s32 7, %v430
    %v432 = vrot.slane %v397, %v431
    %v433 = vlaneseq
    %v434 = vshrl.u32 %v433, 7
    %v435 = vsub.s32 0, %v434
    %v436 = vrot.slane %v398, %v435
    %v437 = vlaneseq
    %v438 = vshrl.u32 %v437, 7
    %v439 = vsub.s32 1, %v438
    %v440 = vrot.slane %v398, %v439
    %v441 = vlaneseq
    %v442 = vshrl.u32 %v441, 7
    %v443 = vsub.s32 2, %v442
    %v444 = vrot.slane %v398, %v443
    %v445 = vlaneseq
    %v446 = vshrl.u32 %v445, 7
    %v447 = vsub.s32 3, %v446
    %v448 = vrot.slane %v398, %v447
    %v449 = vlaneseq
    %v450 = vshrl.u32 %v449, 7
    %v451 = vsub.s32 4, %v450
    %v452 = vrot.slane %v398, %v451
    %v453 = vlaneseq
    %v454 = vshrl.u32 %v453, 7
    %v455 = vsub.s32 5, %v454
    %v456 = vrot.slane %v398, %v455
    %v457 = vlaneseq
    %v458 = vshrl.u32 %v457, 7
    %v459 = vsub.s32 6, %v458
    %v460 = vrot.slane %v398, %v459
    %v461 = vlaneseq
    %v462 = vshrl.u32 %v461, 7
    %v463 = vsub.s32 7, %v462
    %v464 = vrot.slane %v398, %v463
    %v481 = vmul.f32 %v180, %v404
    %v482 = vmul.f32 %v179, %v408
    %v483 = vmul.f32 %v178, %v412
    %v484 = vmul.f32 %v177, %v416
    %v485 = vmul.f32 %v176, %v420
    %v486 = vmul.f32 %v175, %v424
    %v487 = vmul.f32 %v174, %v428
    %v488 = vmul.f32 %v173, %v432
    %v489 = vmul.f32 %v172, %v436
    %v490 = vmul.f32 %v171, %v440
    %v491 = vmul.f32 %v170, %v444
    %v492 = vmul.f32 %v169, %v448
    %v493 = vmul.f32 %v168, %v452
    %v494 = vmul.f32 %v167, %v456
    %v495 = vmul.f32 %v166, %v460
    %v496 = vmul.f32 %v165, %v464
    %v497 = vadd.f32 %v381, %v481
    %v498 = vadd.f32 %v382, %v482
    %v499 = vadd.f32 %v383, %v483
    %v500 = vadd.f32 %v384, %v484
    %v501 = vadd.f32 %v385, %v485
    %v502 = vadd.f32 %v386, %v486
    %v503 = vadd.f32 %v387, %v487
    %v504 = vadd.f32 %v388, %v488
    %v505 = vadd.f32 %v389, %v489
    %v506 = vadd.f32 %v390, %v490
    %v507 = vadd.f32 %v391, %v491
    %v508 = vadd.f32 %v392, %v492
    %v509 = vadd.f32 %v393, %v493
    %v510 = vadd.f32 %v394, %v494
    %v511 = vadd.f32 %v395, %v495
    %v512 = vadd.f32 %v396, %v496
    %513 = vst [vmem:[#allocation10] sm:$0x3f] %v497
    %514 = vst [vmem:[#allocation10 + $0x8] sm:$0x3f] %v498
    %515 = vst [vmem:[#allocation10 + $0x10] sm:$0x3f] %v499
    %516 = vst [vmem:[#allocation10 + $0x18] sm:$0x3f] %v500
    %517 = vst [vmem:[#allocation10 + $0x20] sm:$0x3f] %v501
    %518 = vst [vmem:[#allocation10 + $0x28] sm:$0x3f] %v502
    %519 = vst [vmem:[#allocation10 + $0x30] sm:$0x3f] %v503
    %520 = vst [vmem:[#allocation10 + $0x38] sm:$0x3f] %v504
    %521 = vst [vmem:[#allocation10 + $0x40] sm:$0x3f] %v505
    %522 = vst [vmem:[#allocation10 + $0x48] sm:$0x3f] %v506
    %523 = vst [vmem:[#allocation10 + $0x50] sm:$0x3f] %v507
    %524 = vst [vmem:[#allocation10 + $0x58] sm:$0x3f] %v508
    %525 = vst [vmem:[#allocation10 + $0x60] sm:$0x3f] %v509
    %526 = vst [vmem:[#allocation10 + $0x68] sm:$0x3f] %v510
    %527 = vst [vmem:[#allocation10 + $0x70] sm:$0x3f] %v511
    %528 = vst [vmem:[#allocation10 + $0x78] sm:$0x3f] %v512
    // Predicated region
    $region34: #{tpu_custom_call.1} parent=1 // pred_check
      _
    $region35: #{tpu_custom_call.1} parent=1 // pred_check_branch
      %530 = sbr.rel (0) target = $region37
    $region36: #{tpu_custom_call.1} parent=1 // pred_region
      %s532 = ssub.s32 2048, 2048
      %533 = vsyncadd [#allocation4], %s532
      %s535 = sshll.u32 [#allocation10], 4
      %s536 = int_to_ptr.vmem [resolvable:$true] %s535
      %538 = dma.vmem_to_hbm [thread:$0]  %s536, 2048, %s4, [#allocation4]
    $region37: #{tpu_custom_call.1} parent=1 // pred_fallthru
      _
    // Predicated region
    $region38: #{tpu_custom_call.1} parent=1 // pred_check
      _
    $region39: #{tpu_custom_call.1} parent=1 // pred_check_branch
      %540 = sbr.rel (0) target = $region41
    $region40: #{tpu_custom_call.1} parent=1 // pred_region
      %541 = dma.done [#allocation4], 2048
    $region41: #{tpu_custom_call.1} parent=1 // pred_fallthru
      _
    %542 = vsyncpa [#allocation3], 1
    %543 = vsyncpa [#allocation6], 1
    %544 = vsyncpa [#allocation9], 1
    %545 = vsyncpa [#allocation4], 1

</llo_original>
